<compile_context>
chip_gen: v7x
topology: tpu7x:2x2x1
jax: 0.10.0
libtpu: 0.0.40
codegen_flags: <defaults>
</compile_context>

<pallas_src>
import functools

import jax
import jax.numpy as jnp
from jax.experimental import pallas as pl
from jax.experimental.pallas import tpu as pltpu


def _attn_gp_kernel(x_ref, wqkv_ref, bqkv_ref, wo_ref, bo_ref, o_ref,
                    *, n_head, qk_dim):
    """Single invocation: all heads, fused QKV projection, fc_out — one body."""
    total = n_head * qk_dim

    x = x_ref[...]                                                   # (B, in_dim)

    # Fused Q|K|V projection: one MXU push producing (B, 3*total).
    qkv = jnp.dot(x, wqkv_ref[...],
                  preferred_element_type=jnp.float32) + bqkv_ref[...]

    # Per-head attention, statically unrolled (n_head is tiny).  Head outputs
    # stay register-resident; a single concatenate feeds fc_out — no VMEM
    # scratch, no masked partial stores.
    # TODO(synk): for realistic qk_dim (>=128) or larger n_head, vectorize
    # across heads and use lax.dot_general with batch dims so the outer
    # product and attn@v contractions land on the MXU instead of VPU/XLU.
    head_outs = []
    for h in range(n_head):
        lo = h * qk_dim
        q = qkv[:, lo:lo + qk_dim]                                   # (B, c)
        k = qkv[:, total + lo:total + lo + qk_dim]                   # (B, c)
        v = qkv[:, 2 * total + lo:2 * total + lo + qk_dim]           # (B, c)

        # sim[b, i, j] = q[b, i] * k[b, j]  (per-batch outer product)
        sim = q[:, :, None] * k[:, None, :]                          # (B, c, c)
        sim = sim - jnp.max(sim, axis=-1, keepdims=True)
        e = jnp.exp(sim)
        attn = e / jnp.sum(e, axis=-1, keepdims=True)                # exact softmax

        # out_h[b, i] = sum_j attn[b, i, j] * v[b, j]
        head_outs.append(jnp.sum(attn * v[:, None, :], axis=-1))     # (B, c)

    out = jnp.concatenate(head_outs, axis=-1)                        # (B, total)

    # fc_out once over the concatenated heads; single output store.
    o_ref[...] = (jnp.dot(out, wo_ref[...],
                          preferred_element_type=jnp.float32) + bo_ref[...])


def fuse_params(wq, wk, wv, bq, bk, bv, wo, bo):
    """One-time parameter fusion (do NOT call per forward pass)."""
    w_qkv = jnp.concatenate([wq, wk, wv], axis=-1)       # (in_dim, 3*total)
    b_qkv = jnp.concatenate([bq, bk, bv])[None, :]       # (1, 3*total)
    bo2 = bo[None, :]                                    # (1, out_dim)
    return w_qkv, b_qkv, wo, bo2


def self_attention_gp(x, w_qkv, b_qkv, wo, bo2, *, n_head, qk_dim):
    """x: (B, in_dim); w_qkv: (in_dim, 3*n_head*qk_dim); b_qkv: (1, 3*n_head*qk_dim);
    wo: (n_head*qk_dim, out_dim); bo2: (1, out_dim). Returns (B, out_dim) float32."""
    B, _ = x.shape
    out_dim = wo.shape[-1]

    kernel = functools.partial(_attn_gp_kernel, n_head=n_head, qk_dim=qk_dim)
    vmem_spec = pl.BlockSpec(memory_space=pltpu.MemorySpace.VMEM)

    # TODO(synk): for large B add a grid over row-blocks of x / o with
    # dimension_semantics=("parallel",) (2 TCs on v7x) and size blocks to the
    # per-generation VMEM budget; at B=2 a single grid-less call is optimal.
    return pl.pallas_call(
        kernel,
        out_shape=jax.ShapeDtypeStruct((B, out_dim), jnp.float32),
        in_specs=[vmem_spec] * 5,
        out_specs=vmem_spec,
    )(x, w_qkv, b_qkv, wo, bo2)


def _reference(x, wq, bq, wk, bk, wv, bv, wo, bo, n_head, qk_dim):
    """Pure-JAX reference of the (intended) forward pass."""
    B = x.shape[0]
    q = (x @ wq + bq).reshape(B, n_head, qk_dim)
    k = (x @ wk + bk).reshape(B, n_head, qk_dim)
    v = (x @ wv + bv).reshape(B, n_head, qk_dim)
    sim = jnp.einsum('bni,bnj->bnij', q, k)
    sim = sim - jnp.max(sim, axis=-1, keepdims=True)
    attn = jax.nn.softmax(sim, axis=-1)
    out = jnp.einsum('bnij,bnj->bni', attn, v).reshape(B, n_head * qk_dim)
    return out @ wo + bo


if __name__ == "__main__":
    # Small shapes consistent with Self_Attention_for_GP(in_dim, out_dim, qk_dim, n_head)
    B, in_dim, out_dim, qk_dim, n_head = 2, 32, 16, 8, 4
    total = qk_dim * n_head

    key = jax.random.PRNGKey(0)
    ks = jax.random.split(key, 9)
    x = jax.random.normal(ks[0], (B, in_dim), dtype=jnp.float32)

    # Deterministic synthetic parameters (Linear weights stored as (in, out)).
    scale_in = 1.0 / jnp.sqrt(jnp.float32(in_dim))
    scale_t = 1.0 / jnp.sqrt(jnp.float32(total))
    wq = jax.random.normal(ks[1], (in_dim, total), jnp.float32) * scale_in
    wk = jax.random.normal(ks[2], (in_dim, total), jnp.float32) * scale_in
    wv = jax.random.normal(ks[3], (in_dim, total), jnp.float32) * scale_in
    bq = jax.random.normal(ks[4], (total,), jnp.float32) * scale_in
    bk = jax.random.normal(ks[5], (total,), jnp.float32) * scale_in
    bv = jax.random.normal(ks[6], (total,), jnp.float32) * scale_in
    wo = jax.random.normal(ks[7], (total, out_dim), jnp.float32) * scale_t
    bo = jax.random.normal(ks[8], (out_dim,), jnp.float32) * scale_t

    # Fuse parameters ONCE (init-time), not per call.
    w_qkv, b_qkv, wo_f, bo2 = fuse_params(wq, wk, wv, bq, bk, bv, wo, bo)
    w_qkv, b_qkv, wo_f, bo2 = jax.block_until_ready((w_qkv, b_qkv, wo_f, bo2))

    y = self_attention_gp(x, w_qkv, b_qkv, wo_f, bo2,
                          n_head=n_head, qk_dim=qk_dim)
    y = jax.block_until_ready(y)

    y_ref = _reference(x, wq, bq, wk, bk, wv, bv, wo, bo, n_head, qk_dim)
    assert y.shape == (B, out_dim)
    # Exact softmax divide in-kernel -> tight tolerance.
    assert jnp.allclose(y, y_ref, atol=1e-4, rtol=1e-4), (y, y_ref)

    print("KERNEL_OK")
</pallas_src>

<mosaic_0001>
module attributes {stable_mosaic.version = 11 : i64} {
  func.func @_attn_gp_kernel(%arg0: memref<2x32xf32, #tpu.memory_space<vmem>>, %arg1: memref<32x96xf32, #tpu.memory_space<vmem>>, %arg2: memref<1x96xf32, #tpu.memory_space<vmem>>, %arg3: memref<32x16xf32, #tpu.memory_space<vmem>>, %arg4: memref<1x16xf32, #tpu.memory_space<vmem>>, %arg5: memref<2x16xf32, #tpu.memory_space<vmem>>) attributes {dimension_semantics = [], scalar_prefetch = 0 : i64, scratch_operands = 0 : i64, tpu.core_type = #tpu.core_type<tc>} {
    %c0 = arith.constant 0 : index
    %c0_0 = arith.constant 0 : index
    %0 = vector.load %arg0[%c0, %c0_0] : memref<2x32xf32, #tpu.memory_space<vmem>>, vector<2x32xf32>
    %c0_1 = arith.constant 0 : index
    %c0_2 = arith.constant 0 : index
    %1 = vector.load %arg1[%c0_1, %c0_2] : memref<32x96xf32, #tpu.memory_space<vmem>>, vector<32x96xf32>
    %cst = arith.constant dense<0.000000e+00> : vector<2x96xf32>
    %2 = tpu.matmul %0, %1, %cst {dimension_numbers = #tpu.dot_dimension_numbers<[1], [0], [0], [1], [0, 0, 1, 1], [], []>} : vector<2x32xf32>, vector<32x96xf32>, vector<2x96xf32> -> vector<2x96xf32>
    %c0_3 = arith.constant 0 : index
    %c0_4 = arith.constant 0 : index
    %3 = vector.load %arg2[%c0_3, %c0_4] : memref<1x96xf32, #tpu.memory_space<vmem>>, vector<1x96xf32>
    %4 = vector.broadcast %3 : vector<1x96xf32> to vector<2x96xf32>
    %5 = arith.addf %2, %4 : vector<2x96xf32>
    %6 = vector.extract_strided_slice %5 {offsets = [0, 0], sizes = [2, 8], strides = [1, 1]} : vector<2x96xf32> to vector<2x8xf32>
    %7 = vector.extract_strided_slice %5 {offsets = [0, 32], sizes = [2, 8], strides = [1, 1]} : vector<2x96xf32> to vector<2x8xf32>
    %8 = vector.extract_strided_slice %5 {offsets = [0, 64], sizes = [2, 8], strides = [1, 1]} : vector<2x96xf32> to vector<2x8xf32>
    %9 = vector.shape_cast %6 : vector<2x8xf32> to vector<2x8x1xf32>
    %10 = vector.shape_cast %7 : vector<2x8xf32> to vector<2x1x8xf32>
    %11 = vector.broadcast %9 : vector<2x8x1xf32> to vector<2x8x8xf32>
    %12 = vector.broadcast %10 : vector<2x1x8xf32> to vector<2x8x8xf32>
    %13 = arith.mulf %11, %12 : vector<2x8x8xf32>
    %cst_5 = arith.constant dense<0xFF800000> : vector<2x8xf32>
    %14 = vector.multi_reduction <maximumf>, %13, %cst_5 [2] : vector<2x8x8xf32> to vector<2x8xf32>
    %15 = vector.shape_cast %14 : vector<2x8xf32> to vector<2x8x1xf32>
    %16 = vector.broadcast %15 : vector<2x8x1xf32> to vector<2x8x8xf32>
    %17 = arith.subf %13, %16 : vector<2x8x8xf32>
    %18 = math.exp %17 : vector<2x8x8xf32>
    %cst_6 = arith.constant dense<0.000000e+00> : vector<2x8xf32>
    %19 = vector.multi_reduction <add>, %18, %cst_6 [2] : vector<2x8x8xf32> to vector<2x8xf32>
    %20 = vector.shape_cast %19 : vector<2x8xf32> to vector<2x8x1xf32>
    %21 = vector.broadcast %20 : vector<2x8x1xf32> to vector<2x8x8xf32>
    %22 = arith.divf %18, %21 : vector<2x8x8xf32>
    %23 = vector.shape_cast %8 : vector<2x8xf32> to vector<2x1x8xf32>
    %24 = vector.broadcast %23 : vector<2x1x8xf32> to vector<2x8x8xf32>
    %25 = arith.mulf %22, %24 : vector<2x8x8xf32>
    %cst_7 = arith.constant dense<0.000000e+00> : vector<2x8xf32>
    %26 = vector.multi_reduction <add>, %25, %cst_7 [2] : vector<2x8x8xf32> to vector<2x8xf32>
    %27 = vector.extract_strided_slice %5 {offsets = [0, 8], sizes = [2, 8], strides = [1, 1]} : vector<2x96xf32> to vector<2x8xf32>
    %28 = vector.extract_strided_slice %5 {offsets = [0, 40], sizes = [2, 8], strides = [1, 1]} : vector<2x96xf32> to vector<2x8xf32>
    %29 = vector.extract_strided_slice %5 {offsets = [0, 72], sizes = [2, 8], strides = [1, 1]} : vector<2x96xf32> to vector<2x8xf32>
    %30 = vector.shape_cast %27 : vector<2x8xf32> to vector<2x8x1xf32>
    %31 = vector.shape_cast %28 : vector<2x8xf32> to vector<2x1x8xf32>
    %32 = vector.broadcast %30 : vector<2x8x1xf32> to vector<2x8x8xf32>
    %33 = vector.broadcast %31 : vector<2x1x8xf32> to vector<2x8x8xf32>
    %34 = arith.mulf %32, %33 : vector<2x8x8xf32>
    %cst_8 = arith.constant dense<0xFF800000> : vector<2x8xf32>
    %35 = vector.multi_reduction <maximumf>, %34, %cst_8 [2] : vector<2x8x8xf32> to vector<2x8xf32>
    %36 = vector.shape_cast %35 : vector<2x8xf32> to vector<2x8x1xf32>
    %37 = vector.broadcast %36 : vector<2x8x1xf32> to vector<2x8x8xf32>
    %38 = arith.subf %34, %37 : vector<2x8x8xf32>
    %39 = math.exp %38 : vector<2x8x8xf32>
    %cst_9 = arith.constant dense<0.000000e+00> : vector<2x8xf32>
    %40 = vector.multi_reduction <add>, %39, %cst_9 [2] : vector<2x8x8xf32> to vector<2x8xf32>
    %41 = vector.shape_cast %40 : vector<2x8xf32> to vector<2x8x1xf32>
    %42 = vector.broadcast %41 : vector<2x8x1xf32> to vector<2x8x8xf32>
    %43 = arith.divf %39, %42 : vector<2x8x8xf32>
    %44 = vector.shape_cast %29 : vector<2x8xf32> to vector<2x1x8xf32>
    %45 = vector.broadcast %44 : vector<2x1x8xf32> to vector<2x8x8xf32>
    %46 = arith.mulf %43, %45 : vector<2x8x8xf32>
    %cst_10 = arith.constant dense<0.000000e+00> : vector<2x8xf32>
    %47 = vector.multi_reduction <add>, %46, %cst_10 [2] : vector<2x8x8xf32> to vector<2x8xf32>
    %48 = vector.extract_strided_slice %5 {offsets = [0, 16], sizes = [2, 8], strides = [1, 1]} : vector<2x96xf32> to vector<2x8xf32>
    %49 = vector.extract_strided_slice %5 {offsets = [0, 48], sizes = [2, 8], strides = [1, 1]} : vector<2x96xf32> to vector<2x8xf32>
    %50 = vector.extract_strided_slice %5 {offsets = [0, 80], sizes = [2, 8], strides = [1, 1]} : vector<2x96xf32> to vector<2x8xf32>
    %51 = vector.shape_cast %48 : vector<2x8xf32> to vector<2x8x1xf32>
    %52 = vector.shape_cast %49 : vector<2x8xf32> to vector<2x1x8xf32>
    %53 = vector.broadcast %51 : vector<2x8x1xf32> to vector<2x8x8xf32>
    %54 = vector.broadcast %52 : vector<2x1x8xf32> to vector<2x8x8xf32>
    %55 = arith.mulf %53, %54 : vector<2x8x8xf32>
    %cst_11 = arith.constant dense<0xFF800000> : vector<2x8xf32>
    %56 = vector.multi_reduction <maximumf>, %55, %cst_11 [2] : vector<2x8x8xf32> to vector<2x8xf32>
    %57 = vector.shape_cast %56 : vector<2x8xf32> to vector<2x8x1xf32>
    %58 = vector.broadcast %57 : vector<2x8x1xf32> to vector<2x8x8xf32>
    %59 = arith.subf %55, %58 : vector<2x8x8xf32>
    %60 = math.exp %59 : vector<2x8x8xf32>
    %cst_12 = arith.constant dense<0.000000e+00> : vector<2x8xf32>
    %61 = vector.multi_reduction <add>, %60, %cst_12 [2] : vector<2x8x8xf32> to vector<2x8xf32>
    %62 = vector.shape_cast %61 : vector<2x8xf32> to vector<2x8x1xf32>
    %63 = vector.broadcast %62 : vector<2x8x1xf32> to vector<2x8x8xf32>
    %64 = arith.divf %60, %63 : vector<2x8x8xf32>
    %65 = vector.shape_cast %50 : vector<2x8xf32> to vector<2x1x8xf32>
    %66 = vector.broadcast %65 : vector<2x1x8xf32> to vector<2x8x8xf32>
    %67 = arith.mulf %64, %66 : vector<2x8x8xf32>
    %cst_13 = arith.constant dense<0.000000e+00> : vector<2x8xf32>
    %68 = vector.multi_reduction <add>, %67, %cst_13 [2] : vector<2x8x8xf32> to vector<2x8xf32>
    %69 = vector.extract_strided_slice %5 {offsets = [0, 24], sizes = [2, 8], strides = [1, 1]} : vector<2x96xf32> to vector<2x8xf32>
    %70 = vector.extract_strided_slice %5 {offsets = [0, 56], sizes = [2, 8], strides = [1, 1]} : vector<2x96xf32> to vector<2x8xf32>
    %71 = vector.extract_strided_slice %5 {offsets = [0, 88], sizes = [2, 8], strides = [1, 1]} : vector<2x96xf32> to vector<2x8xf32>
    %72 = vector.shape_cast %69 : vector<2x8xf32> to vector<2x8x1xf32>
    %73 = vector.shape_cast %70 : vector<2x8xf32> to vector<2x1x8xf32>
    %74 = vector.broadcast %72 : vector<2x8x1xf32> to vector<2x8x8xf32>
    %75 = vector.broadcast %73 : vector<2x1x8xf32> to vector<2x8x8xf32>
    %76 = arith.mulf %74, %75 : vector<2x8x8xf32>
    %cst_14 = arith.constant dense<0xFF800000> : vector<2x8xf32>
    %77 = vector.multi_reduction <maximumf>, %76, %cst_14 [2] : vector<2x8x8xf32> to vector<2x8xf32>
    %78 = vector.shape_cast %77 : vector<2x8xf32> to vector<2x8x1xf32>
    %79 = vector.broadcast %78 : vector<2x8x1xf32> to vector<2x8x8xf32>
    %80 = arith.subf %76, %79 : vector<2x8x8xf32>
    %81 = math.exp %80 : vector<2x8x8xf32>
    %cst_15 = arith.constant dense<0.000000e+00> : vector<2x8xf32>
    %82 = vector.multi_reduction <add>, %81, %cst_15 [2] : vector<2x8x8xf32> to vector<2x8xf32>
    %83 = vector.shape_cast %82 : vector<2x8xf32> to vector<2x8x1xf32>
    %84 = vector.broadcast %83 : vector<2x8x1xf32> to vector<2x8x8xf32>
    %85 = arith.divf %81, %84 : vector<2x8x8xf32>
    %86 = vector.shape_cast %71 : vector<2x8xf32> to vector<2x1x8xf32>
    %87 = vector.broadcast %86 : vector<2x1x8xf32> to vector<2x8x8xf32>
    %88 = arith.mulf %85, %87 : vector<2x8x8xf32>
    %cst_16 = arith.constant dense<0.000000e+00> : vector<2x8xf32>
    %89 = vector.multi_reduction <add>, %88, %cst_16 [2] : vector<2x8x8xf32> to vector<2x8xf32>
    %90 = tpu.concatenate %26, %47, %68, %89 in 1 : vector<2x8xf32>, vector<2x8xf32>, vector<2x8xf32>, vector<2x8xf32> -> vector<2x32xf32>
    %c0_17 = arith.constant 0 : index
    %c0_18 = arith.constant 0 : index
    %91 = vector.load %arg3[%c0_17, %c0_18] : memref<32x16xf32, #tpu.memory_space<vmem>>, vector<32x16xf32>
    %cst_19 = arith.constant dense<0.000000e+00> : vector<2x16xf32>
    %92 = tpu.matmul %90, %91, %cst_19 {dimension_numbers = #tpu.dot_dimension_numbers<[1], [0], [0], [1], [0, 0, 1, 1], [], []>} : vector<2x32xf32>, vector<32x16xf32>, vector<2x16xf32> -> vector<2x16xf32>
    %c0_20 = arith.constant 0 : index
    %c0_21 = arith.constant 0 : index
    %93 = vector.load %arg4[%c0_20, %c0_21] : memref<1x16xf32, #tpu.memory_space<vmem>>, vector<1x16xf32>
    %94 = vector.broadcast %93 : vector<1x16xf32> to vector<2x16xf32>
    %95 = arith.addf %92, %94 : vector<2x16xf32>
    %c0_22 = arith.constant 0 : index
    %c0_23 = arith.constant 0 : index
    %96 = vector.load %arg5[%c0_22, %c0_23] : memref<2x16xf32, #tpu.memory_space<vmem>>, vector<2x16xf32>
    tpu.vector_store %arg5[%c0_22, %c0_23], %95 {strides = array<i32>} : memref<2x16xf32, #tpu.memory_space<vmem>>, vector<2x16xf32>,
    return
  }
}

</mosaic_0001>

<llo_original>
// kernel: tpu_custom_call.1
$region0: #{tpu_custom_call.1}
  #allocation0 [shape = 'u32[]', space=smem, size = 0x4, offset = 0x4, fixed_abs, tag = 'smem constant byte address 0x4 - core index']
  #allocation1 [shape = 'u32[144,128]{1,0:T(1,128)}', space=vmem, size = 0x12000, scoped, tag = 'internal scratch']
  %s0 = inlined_call_operand.vmem [shape: f32[2,32], index: 0, kind: input, shape index: {}]
  %s1 = inlined_call_operand.vmem [shape: f32[32,96], index: 1, kind: input, shape index: {}]
  %s2 = inlined_call_operand.vmem [shape: f32[1,96], index: 2, kind: input, shape index: {}]
  %s3 = inlined_call_operand.vmem [shape: f32[32,16], index: 3, kind: input, shape index: {}]
  %s4 = inlined_call_operand.vmem [shape: f32[1,16], index: 4, kind: input, shape index: {}]
  %s5 = inlined_call_operand.hbm [shape: f32[2,16], index: 5, kind: output, shape index: {}]
  %s6 = sld [smem:[#allocation0]]
  $region30: #{tpu_custom_call.1} parent=0
    _
  %s8 = ssub.s32 1, %s6
  %s9 = scalar_select 0, %s8, %s6
  $region1: #{tpu_custom_call.1} parent=0
    #allocation2 [shape = 'u8[1024]{0}', space=vmem, size = 0x400, scoped, tag = 'output window, operand 0, single buffered']
    #allocation3 [shape = 's32[1]{0}', space=sflag, size = 0x4, scoped, tag = 'scoped memory for tpu_custom_call.1']
    %10 = vsyncpa [#allocation3], 0
    // Predicated region
    $region2: #{tpu_custom_call.1} parent=1 // pred_check
      _
    $region3: #{tpu_custom_call.1} parent=1 // pred_check_branch
      %12 = sbr.rel (0) target = $region5
    $region4: #{tpu_custom_call.1} parent=1 // pred_region
      _
    $region5: #{tpu_custom_call.1} parent=1 // pred_fallthru
      _
    // Predicated region
    $region6: #{tpu_custom_call.1} parent=1 // pred_check
      _
    $region7: #{tpu_custom_call.1} parent=1 // pred_check_branch
      %14 = sbr.rel (0) target = $region9
    $region8: #{tpu_custom_call.1} parent=1 // pred_region
      _
    $region9: #{tpu_custom_call.1} parent=1 // pred_fallthru
      _
    // Predicated region
    $region10: #{tpu_custom_call.1} parent=1 // pred_check
      _
    $region11: #{tpu_custom_call.1} parent=1 // pred_check_branch
      %16 = sbr.rel (0) target = $region13
    $region12: #{tpu_custom_call.1} parent=1 // pred_region
      _
    $region13: #{tpu_custom_call.1} parent=1 // pred_fallthru
      _
    // Predicated region
    $region14: #{tpu_custom_call.1} parent=1 // pred_check
      _
    $region15: #{tpu_custom_call.1} parent=1 // pred_check_branch
      %18 = sbr.rel (0) target = $region17
    $region16: #{tpu_custom_call.1} parent=1 // pred_region
      _
    $region17: #{tpu_custom_call.1} parent=1 // pred_fallthru
      _
    // Predicated region
    $region18: #{tpu_custom_call.1} parent=1 // pred_check
      _
    $region19: #{tpu_custom_call.1} parent=1 // pred_check_branch
      %20 = sbr.rel (0) target = $region21
    $region20: #{tpu_custom_call.1} parent=1 // pred_region
      _
    $region21: #{tpu_custom_call.1} parent=1 // pred_fallthru
      _
    %v21 = vld [vmem:[%s0] sm:$0x3]
    %v22 = vld [vmem:[%s1] sm:$0xff]
    %v23 = vld [vmem:[%s1 + $0x8] sm:$0xff]
    %v24 = vld [vmem:[%s1 + $0x10] sm:$0xff]
    %v25 = vld [vmem:[%s1 + $0x18] sm:$0xff]
    %v26 = vld [vmem:[%s2] sm:$0x1]
    %v28 = vlaneseq
    %v29 = vshrl.u32 %v28, 7
    %v30 = vsub.s32 0, %v29
    %v31 = vrot.slane %v26, %v30
    %vm33 = vcmask 261120
    %v35 = vsel %vm33, %v21, 0
    %37 = vmatprep.subr.mxu0 0.0
    %38 = vmatpush1.msra.mxu0 %v22
    %39 = vmatprep.subr.mxu0 0.0
    %40 = vmatpush1.msra.mxu0 %v23
    %41 = vmatprep.subr.mxu0 0.0
    %42 = vmatpush1.msra.mxu0 %v24
    %43 = vmatprep.subr.mxu0 0.0
    %44 = vmatpush1.msra.mxu0 %v25
    %45 = vmatprep.subr.mxu0 0.0
    %46 = vmatpush1.msra.mxu0 0.0
    %47 = vmatprep.subr.mxu0 0.0
    %48 = vmatpush1.msra.mxu0 0.0
    %49 = vmatprep.subr.mxu0 0.0
    %50 = vmatpush1.msra.mxu0 0.0
    %51 = vmatprep.subr.mxu0 0.0
    %52 = vmatpush1.msra.mxu0 0.0
    %53 = vmatprep.subr.mxu0 0.0
    %54 = vmatpush1.msra.mxu0 0.0
    %55 = vmatprep.subr.mxu0 0.0
    %56 = vmatpush1.msra.mxu0 0.0
    %57 = vmatprep.subr.mxu0 0.0
    %58 = vmatpush1.msra.mxu0 0.0
    %59 = vmatprep.subr.mxu0 0.0
    %60 = vmatpush1.msra.mxu0 0.0
    %61 = vmatprep.subr.mxu0 0.0
    %62 = vmatpush1.msra.mxu0 0.0
    %63 = vmatprep.subr.mxu0 0.0
    %64 = vmatpush1.msra.mxu0 0.0
    %65 = vmatprep.subr.mxu0 0.0
    %66 = vmatpush1.msra.mxu0 0.0
    %67 = vmatprep.subr.mxu0 0.0
    %68 = vmatpush1.msra.mxu0 0.0
    %69 = vmatprep.subr.mxu0 0.0
    %70 = vmatpush1.msra.mxu0 0.0
    %71 = vmatprep.subr.mxu0 0.0
    %72 = vmatpush1.msra.mxu0 0.0
    %73 = vmatprep.subr.mxu0 0.0
    %74 = vmatpush1.msra.mxu0 0.0
    %75 = vmatprep.subr.mxu0 0.0
    %76 = vmatpush1.msra.mxu0 0.0
    %77 = vmatprep.subr.mxu0 0.0
    %78 = vmatpush1.msra.mxu0 0.0
    %79 = vmatprep.subr.mxu0 0.0
    %80 = vmatpush1.msra.mxu0 0.0
    %81 = vmatprep.subr.mxu0 0.0
    %82 = vmatpush1.msra.mxu0 0.0
    %83 = vmatprep.subr.mxu0 0.0
    %84 = vmatpush1.msra.mxu0 0.0
    %85 = vmatprep.subr.mxu0 0.0
    %86 = vmatpush1.msra.mxu0 0.0
    %87 = vmatprep.subr.mxu0 0.0
    %88 = vmatpush1.msra.mxu0 0.0
    %89 = vmatprep.subr.mxu0 0.0
    %90 = vmatpush1.msra.mxu0 0.0
    %91 = vmatprep.subr.mxu0 0.0
    %92 = vmatpush1.msra.mxu0 0.0
    %93 = vmatprep.subr.mxu0 0.0
    %94 = vmatpush1.msra.mxu0 0.0
    %95 = vmatprep.subr.mxu0 0.0
    %96 = vmatpush1.msra.mxu0 0.0
    %97 = vmatprep.subr.mxu0 0.0
    %98 = vmatpush1.msra.mxu0 0.0
    %99 = vmatprep.subr.mxu0 0.0
    %100 = vmatpush1.msra.mxu0 0.0
    %101 = vmatprep.mubr.f32.mxu0 0.0
    %102 = vmatmul.mubr.f32.gmra.mrb[0].mxu0 %v35
    %v103 = vpop.f32.mrb[0].mxu0
    %v104 = vadd.f32 %v31, %v103
    %v105 = vpop.f32.mrb[0].mxu0
    %106 = vdwg.mxu0
    %v107 = vlaneseq
    %v108 = vshrl.u32 %v107, 7
    %v109 = vsub.s32 0, %v108
    %v110 = vrot.slane %v104, %v109
    %112 = vbcast.lane.b32.xlu0 %v110, 256
    %v113 = vpop.permute.xlu0 %112
    %v114 = vlaneseq
    %v115 = vshrl.u32 %v114, 7
    %v116 = vsub.s32 1, %v115
    %v117 = vrot.slane %v104, %v116
    %119 = vbcast.lane.b32.xlu0 %v117, 256
    %v120 = vpop.permute.xlu0 %119
    %v123 = vunpack.c.l.s4 1966171168
    %v124 = vunpack.c.0.s8 %v123
    %v125 = vlaneseq
    %v126 = vshrl.u32 %v125, 7
    %v127 = vsub.s32 %v124, %v126
    %v128 = vrot.slane %v104, %v127
    %v129 = vcombine.high %v128, %v128
    %v131 = vunpack.c.l.s4 1966171168
    %v132 = vunpack.c.0.s8 %v131
    %v133 = vlaneseq
    %v134 = vshrl.u32 %v133, 7
    %v135 = vsub.s32 %v132, %v134
    %v136 = vrot.slane %v128, %v135
    %v138 = vunpack.c.l.s4 1966171168
    %v139 = vunpack.c.0.s8 %v138
    %v140 = vlaneseq
    %v141 = vshrl.u32 %v140, 7
    %v142 = vsub.s32 %v139, %v141
    %v143 = vrot.slane %v129, %v142
    %v144 = vlaneseq
    %v145 = vshrl.u32 %v144, 7
    %v146 = vsub.s32 0, %v145
    %v147 = vrot.slane %v136, %v146
    %v148 = vlaneseq
    %v149 = vshrl.u32 %v148, 7
    %v150 = vsub.s32 0, %v149
    %v151 = vrot.slane %v143, %v150
    %v154 = vmul.f32 %v113, %v147
    %v155 = vmul.f32 %v120, %v151
    %vm156 = vcmask 326912
    %v157 = vsel %vm156, %v154, -inf
    %158 = vmax.xlane.f32.xlu0 %v157
    %v159 = vpop.xlane.xlu0 %158
    %v160 = vsel %vm156, %v155, -inf
    %161 = vmax.xlane.f32.xlu0 %v160
    %v162 = vpop.xlane.xlu0 %161
    %v163 = vsub.f32 %v154, %v159
    %v164 = vsub.f32 %v155, %v162
    %v165 = vmul.f32 %v163, 1.442695
    %v166 = vpow.pop %v165
    %v167 = vmul.f32 %v164, 1.442695
    %v168 = vpow.pop %v167
    %171 = vrot.lane.b32.xlu0 %v166, 96
    %v172 = vpop.permute.xlu0 %171
    %173 = vrot.lane.b32.xlu0 %v168, 96
    %v174 = vpop.permute.xlu0 %173
    %vm177 = vcmask 64512
    %v178 = vsel %vm177, %v172, 0.0
    %179 = vadd.xlane.f32.xlu0 %v178
    %v180 = vpop.xlane.xlu0 %179
    %v181 = vsel %vm177, %v174, 0.0
    %182 = vadd.xlane.f32.xlu0 %v181
    %v183 = vpop.xlane.xlu0 %182
    %v184 = vrcp.pop %v180
    %v185 = vmul.f32 %v166, %v184
    %v186 = vrcp.pop %v183
    %v187 = vmul.f32 %v168, %v186
    %188 = vrot.lane.b32.xlu0 %v147, 96
    %v189 = vpop.permute.xlu0 %188
    %190 = vrot.lane.b32.xlu0 %v151, 96
    %v191 = vpop.permute.xlu0 %190
    %v194 = vmul.f32 %v185, %v189
    %v195 = vmul.f32 %v187, %v191
    %198 = vrot.lane.b32.xlu0 %v194, 96
    %v199 = vpop.permute.xlu0 %198
    %200 = vrot.lane.b32.xlu0 %v195, 96
    %v201 = vpop.permute.xlu0 %200
    %v204 = vsel %vm177, %v199, 0.0
    %205 = vadd.xlane.f32.xlu0 %v204
    %v206 = vpop.xlane.xlu0 %205
    %v207 = vsel %vm177, %v201, 0.0
    %208 = vadd.xlane.f32.xlu0 %v207
    %v209 = vpop.xlane.xlu0 %208
    %s211 = sor.u32 256, 8
    %212 = vbcast.lane.b32.xlu0 %v110, %s211
    %v213 = vpop.permute.xlu0 %212
    %s215 = sor.u32 256, 8
    %216 = vbcast.lane.b32.xlu0 %v117, %s215
    %v217 = vpop.permute.xlu0 %216
    %v218 = vmul.f32 %v213, %v147
    %v219 = vmul.f32 %v217, %v151
    %vm220 = vcmask 392512
    %v221 = vsel %vm220, %v218, -inf
    %222 = vmax.xlane.f32.xlu0 %v221
    %v223 = vpop.xlane.xlu0 %222
    %v224 = vsel %vm220, %v219, -inf
    %225 = vmax.xlane.f32.xlu0 %v224
    %v226 = vpop.xlane.xlu0 %225
    %v227 = vsub.f32 %v218, %v223
    %v228 = vsub.f32 %v219, %v226
    %v229 = vmul.f32 %v227, 1.442695
    %v230 = vpow.pop %v229
    %v231 = vmul.f32 %v228, 1.442695
    %v232 = vpow.pop %v231
    %235 = vrot.lane.b32.xlu0 %v230, 88
    %v236 = vpop.permute.xlu0 %235
    %237 = vrot.lane.b32.xlu0 %v232, 88
    %v238 = vpop.permute.xlu0 %237
    %v241 = vsel %vm177, %v236, 0.0
    %242 = vadd.xlane.f32.xlu0 %v241
    %v243 = vpop.xlane.xlu0 %242
    %v244 = vsel %vm177, %v238, 0.0
    %245 = vadd.xlane.f32.xlu0 %v244
    %v246 = vpop.xlane.xlu0 %245
    %v247 = vrcp.pop %v243
    %v248 = vmul.f32 %v230, %v247
    %v249 = vrcp.pop %v246
    %v250 = vmul.f32 %v232, %v249
    %v251 = vmul.f32 %v248, %v189
    %v252 = vmul.f32 %v250, %v191
    %255 = vrot.lane.b32.xlu0 %v251, 88
    %v256 = vpop.permute.xlu0 %255
    %257 = vrot.lane.b32.xlu0 %v252, 88
    %v258 = vpop.permute.xlu0 %257
    %v261 = vsel %vm177, %v256, 0.0
    %262 = vadd.xlane.f32.xlu0 %v261
    %v263 = vpop.xlane.xlu0 %262
    %v264 = vsel %vm177, %v258, 0.0
    %265 = vadd.xlane.f32.xlu0 %v264
    %v266 = vpop.xlane.xlu0 %265
    %s268 = sor.u32 256, 16
    %269 = vbcast.lane.b32.xlu0 %v110, %s268
    %v270 = vpop.permute.xlu0 %269
    %s272 = sor.u32 256, 16
    %273 = vbcast.lane.b32.xlu0 %v117, %s272
    %v274 = vpop.permute.xlu0 %273
    %v275 = vmul.f32 %v270, %v147
    %v276 = vmul.f32 %v274, %v151
    %vm277 = vcmask 458112
    %v278 = vsel %vm277, %v275, -inf
    %279 = vmax.xlane.f32.xlu0 %v278
    %v280 = vpop.xlane.xlu0 %279
    %v281 = vsel %vm277, %v276, -inf
    %282 = vmax.xlane.f32.xlu0 %v281
    %v283 = vpop.xlane.xlu0 %282
    %v284 = vsub.f32 %v275, %v280
    %v285 = vsub.f32 %v276, %v283
    %v286 = vmul.f32 %v284, 1.442695
    %v287 = vpow.pop %v286
    %v288 = vmul.f32 %v285, 1.442695
    %v289 = vpow.pop %v288
    %292 = vrot.lane.b32.xlu0 %v287, 80
    %v293 = vpop.permute.xlu0 %292
    %294 = vrot.lane.b32.xlu0 %v289, 80
    %v295 = vpop.permute.xlu0 %294
    %v298 = vsel %vm177, %v293, 0.0
    %299 = vadd.xlane.f32.xlu0 %v298
    %v300 = vpop.xlane.xlu0 %299
    %v301 = vsel %vm177, %v295, 0.0
    %302 = vadd.xlane.f32.xlu0 %v301
    %v303 = vpop.xlane.xlu0 %302
    %v304 = vrcp.pop %v300
    %v305 = vmul.f32 %v287, %v304
    %v306 = vrcp.pop %v303
    %v307 = vmul.f32 %v289, %v306
    %v308 = vmul.f32 %v305, %v189
    %v309 = vmul.f32 %v307, %v191
    %312 = vrot.lane.b32.xlu0 %v308, 80
    %v313 = vpop.permute.xlu0 %312
    %314 = vrot.lane.b32.xlu0 %v309, 80
    %v315 = vpop.permute.xlu0 %314
    %v318 = vsel %vm177, %v313, 0.0
    %319 = vadd.xlane.f32.xlu0 %v318
    %v320 = vpop.xlane.xlu0 %319
    %v321 = vsel %vm177, %v315, 0.0
    %322 = vadd.xlane.f32.xlu0 %v321
    %v323 = vpop.xlane.xlu0 %322
    %s325 = sor.u32 256, 24
    %326 = vbcast.lane.b32.xlu0 %v110, %s325
    %v327 = vpop.permute.xlu0 %326
    %s329 = sor.u32 256, 24
    %330 = vbcast.lane.b32.xlu0 %v117, %s329
    %v331 = vpop.permute.xlu0 %330
    %v332 = vmul.f32 %v327, %v147
    %v333 = vmul.f32 %v331, %v151
    %vm334 = vcmask 523712
    %v335 = vsel %vm334, %v332, -inf
    %336 = vmax.xlane.f32.xlu0 %v335
    %v337 = vpop.xlane.xlu0 %336
    %v338 = vsel %vm334, %v333, -inf
    %339 = vmax.xlane.f32.xlu0 %v338
    %v340 = vpop.xlane.xlu0 %339
    %v341 = vsub.f32 %v332, %v337
    %v342 = vsub.f32 %v333, %v340
    %v343 = vmul.f32 %v341, 1.442695
    %v344 = vpow.pop %v343
    %v345 = vmul.f32 %v342, 1.442695
    %v346 = vpow.pop %v345
    %349 = vrot.lane.b32.xlu0 %v344, 72
    %v350 = vpop.permute.xlu0 %349
    %351 = vrot.lane.b32.xlu0 %v346, 72
    %v352 = vpop.permute.xlu0 %351
    %v355 = vsel %vm177, %v350, 0.0
    %356 = vadd.xlane.f32.xlu0 %v355
    %v357 = vpop.xlane.xlu0 %356
    %v358 = vsel %vm177, %v352, 0.0
    %359 = vadd.xlane.f32.xlu0 %v358
    %v360 = vpop.xlane.xlu0 %359
    %v361 = vrcp.pop %v357
    %v362 = vmul.f32 %v344, %v361
    %v363 = vrcp.pop %v360
    %v364 = vmul.f32 %v346, %v363
    %v365 = vmul.f32 %v362, %v189
    %v366 = vmul.f32 %v364, %v191
    %369 = vrot.lane.b32.xlu0 %v365, 72
    %v370 = vpop.permute.xlu0 %369
    %371 = vrot.lane.b32.xlu0 %v366, 72
    %v372 = vpop.permute.xlu0 %371
    %v375 = vsel %vm177, %v370, 0.0
    %376 = vadd.xlane.f32.xlu0 %v375
    %v377 = vpop.xlane.xlu0 %376
    %v378 = vsel %vm177, %v372, 0.0
    %379 = vadd.xlane.f32.xlu0 %v378
    %v380 = vpop.xlane.xlu0 %379
    %v383 = vlaneseq
    %v384 = vand.u32 %v383, 127
    %v385 = vlaneseq
    %v386 = vshrl.u32 %v385, 7
    %v387 = vsub.s32 %v384, %v386
    %v388 = vrot.slane %v206, %v387
    %v389 = vlaneseq
    %v390 = vshrl.u32 %v389, 7
    %v391 = vsub.s32 %v384, %v390
    %v392 = vrot.slane %v209, %v391
    %vm393 = vcmask 1041409
    %v394 = vsel %vm393, %v392, %v388
    %v398 = vadd.s32 %v384, 4294967288
    %v399 = vlaneseq
    %v400 = vshrl.u32 %v399, 7
    %v401 = vsub.s32 %v398, %v400
    %v402 = vrot.slane %v263, %v401
    %v403 = vlaneseq
    %v404 = vshrl.u32 %v403, 7
    %v405 = vsub.s32 %v398, %v404
    %v406 = vrot.slane %v266, %v405
    %v407 = vsel %vm393, %v406, %v402
    %v411 = vadd.s32 %v384, 4294967280
    %v412 = vlaneseq
    %v413 = vshrl.u32 %v412, 7
    %v414 = vsub.s32 %v411, %v413
    %v415 = vrot.slane %v320, %v414
    %v416 = vlaneseq
    %v417 = vshrl.u32 %v416, 7
    %v418 = vsub.s32 %v411, %v417
    %v419 = vrot.slane %v323, %v418
    %v420 = vsel %vm393, %v419, %v415
    %v424 = vadd.s32 %v384, 4294967272
    %v425 = vlaneseq
    %v426 = vshrl.u32 %v425, 7
    %v427 = vsub.s32 %v424, %v426
    %v428 = vrot.slane %v377, %v427
    %v429 = vlaneseq
    %v430 = vshrl.u32 %v429, 7
    %v431 = vsub.s32 %v424, %v430
    %v432 = vrot.slane %v380, %v431
    %v433 = vsel %vm393, %v432, %v428
    %v435 = vsel %vm177, %v394, %v407
    %vm436 = vcmask 130048
    %v437 = vsel %vm436, %v435, %v420
    %vm438 = vcmask 195584
    %v439 = vsel %vm438, %v437, %v433
    %v440 = vld [vmem:[%s3] sm:$0xff]
    %v441 = vld [vmem:[%s3 + $0x8] sm:$0xff]
    %v442 = vld [vmem:[%s3 + $0x10] sm:$0xff]
    %v443 = vld [vmem:[%s3 + $0x18] sm:$0xff]
    %v444 = vld [vmem:[%s4] sm:$0x1]
    %v446 = vlaneseq
    %v447 = vshrl.u32 %v446, 7
    %v448 = vsub.s32 0, %v447
    %v449 = vrot.slane %v444, %v448
    %v452 = vsel %vm33, %v439, 0
    %454 = vmatprep.subr.mxu0 0.0
    %455 = vmatpush1.msra.mxu0 %v440
    %456 = vmatprep.subr.mxu0 0.0
    %457 = vmatpush1.msra.mxu0 %v441
    %458 = vmatprep.subr.mxu0 0.0
    %459 = vmatpush1.msra.mxu0 %v442
    %460 = vmatprep.subr.mxu0 0.0
    %461 = vmatpush1.msra.mxu0 %v443
    %462 = vmatprep.subr.mxu0 0.0
    %463 = vmatpush1.msra.mxu0 0.0
    %464 = vmatprep.subr.mxu0 0.0
    %465 = vmatpush1.msra.mxu0 0.0
    %466 = vmatprep.subr.mxu0 0.0
    %467 = vmatpush1.msra.mxu0 0.0
    %468 = vmatprep.subr.mxu0 0.0
    %469 = vmatpush1.msra.mxu0 0.0
    %470 = vmatprep.subr.mxu0 0.0
    %471 = vmatpush1.msra.mxu0 0.0
    %472 = vmatprep.subr.mxu0 0.0
    %473 = vmatpush1.msra.mxu0 0.0
    %474 = vmatprep.subr.mxu0 0.0
    %475 = vmatpush1.msra.mxu0 0.0
    %476 = vmatprep.subr.mxu0 0.0
    %477 = vmatpush1.msra.mxu0 0.0
    %478 = vmatprep.subr.mxu0 0.0
    %479 = vmatpush1.msra.mxu0 0.0
    %480 = vmatprep.subr.mxu0 0.0
    %481 = vmatpush1.msra.mxu0 0.0
    %482 = vmatprep.subr.mxu0 0.0
    %483 = vmatpush1.msra.mxu0 0.0
    %484 = vmatprep.subr.mxu0 0.0
    %485 = vmatpush1.msra.mxu0 0.0
    %486 = vmatprep.subr.mxu0 0.0
    %487 = vmatpush1.msra.mxu0 0.0
    %488 = vmatprep.subr.mxu0 0.0
    %489 = vmatpush1.msra.mxu0 0.0
    %490 = vmatprep.subr.mxu0 0.0
    %491 = vmatpush1.msra.mxu0 0.0
    %492 = vmatprep.subr.mxu0 0.0
    %493 = vmatpush1.msra.mxu0 0.0
    %494 = vmatprep.subr.mxu0 0.0
    %495 = vmatpush1.msra.mxu0 0.0
    %496 = vmatprep.subr.mxu0 0.0
    %497 = vmatpush1.msra.mxu0 0.0
    %498 = vmatprep.subr.mxu0 0.0
    %499 = vmatpush1.msra.mxu0 0.0
    %500 = vmatprep.subr.mxu0 0.0
    %501 = vmatpush1.msra.mxu0 0.0
    %502 = vmatprep.subr.mxu0 0.0
    %503 = vmatpush1.msra.mxu0 0.0
    %504 = vmatprep.subr.mxu0 0.0
    %505 = vmatpush1.msra.mxu0 0.0
    %506 = vmatprep.subr.mxu0 0.0
    %507 = vmatpush1.msra.mxu0 0.0
    %508 = vmatprep.subr.mxu0 0.0
    %509 = vmatpush1.msra.mxu0 0.0
    %510 = vmatprep.subr.mxu0 0.0
    %511 = vmatpush1.msra.mxu0 0.0
    %512 = vmatprep.subr.mxu0 0.0
    %513 = vmatpush1.msra.mxu0 0.0
    %514 = vmatprep.subr.mxu0 0.0
    %515 = vmatpush1.msra.mxu0 0.0
    %516 = vmatprep.subr.mxu0 0.0
    %517 = vmatpush1.msra.mxu0 0.0
    %518 = vmatprep.mubr.f32.mxu0 0.0
    %519 = vmatmul.mubr.f32.gmra.mrb[0].mxu0 %v452
    %v520 = vpop.f32.mrb[0].mxu0
    %v521 = vadd.f32 %v449, %v520
    %v522 = vpop.f32.mrb[0].mxu0
    %523 = vdwg.mxu0
    %vm524 = vcmask 123904
    %525 = vst.msk [vmem:[#allocation2] sm:$0x3] %vm524, %v521
    // Predicated region
    $region22: #{tpu_custom_call.1} parent=1 // pred_check
      _
    $region23: #{tpu_custom_call.1} parent=1 // pred_check_branch
      %527 = sbr.rel (0) target = $region25
    $region24: #{tpu_custom_call.1} parent=1 // pred_region
      %s529 = ssub.s32 32, 32
      %530 = vsyncadd [#allocation3], %s529
      %s532 = sshll.u32 [#allocation2], 4
      %s533 = int_to_ptr.vmem [resolvable:$true] %s532
      %535 = dma.vmem_to_hbm [thread:$0]  %s533, 32, %s5, [#allocation3]
    $region25: #{tpu_custom_call.1} parent=1 // pred_fallthru
      _
    // Predicated region
    $region26: #{tpu_custom_call.1} parent=1 // pred_check
      _
    $region27: #{tpu_custom_call.1} parent=1 // pred_check_branch
      %537 = sbr.rel (0) target = $region29
    $region28: #{tpu_custom_call.1} parent=1 // pred_region
      %538 = dma.done [#allocation3], 32
    $region29: #{tpu_custom_call.1} parent=1 // pred_fallthru
      _
    %539 = vsyncpa [#allocation3], 1

</llo_original>
